<compile_context>
chip_gen: v6e
topology: v6e:2x2x1
jax: 0.10.0
libtpu: 0.0.40
codegen_flags: <defaults>
</compile_context>

<pallas_src>
import functools

import jax
import jax.numpy as jnp
from jax import lax
from jax.experimental import pallas as pl
from jax.experimental.pallas import tpu as pltpu


def _label_smooth_loss_kernel(
    labels_ref, x_ref, out_ref, *, num_classes, epsilon, total_rows, tile_rows
):
    i = pl.program_id(0)

    # Initialize the resident SMEM accumulator on the first grid step.
    @pl.when(i == 0)
    def _init():
        out_ref[0, 0] = 0.0

    x = x_ref[...].astype(jnp.float32)  # (TB, K), f32 compute regardless of input dtype
    tb, k = x.shape

    # Numerically stable shift; exp/log land on the EUP, reductions on the XLU.
    m = jnp.max(x, axis=1, keepdims=True)                      # (TB, 1)
    shifted = x - m                                            # (TB, K)
    lse = jnp.log(jnp.sum(jnp.exp(shifted), axis=1, keepdims=True))  # (TB, 1)

    # sum_k log_probs = sum_k shifted - K * lse  (K*lse folded analytically below)
    sum_shifted = jnp.sum(shifted, axis=1, keepdims=True)      # (TB, 1)

    # log_probs[target] = shifted[target] - lse ; gather via masked reduction.
    labels = labels_ref[...]                                   # (TB, 1) int32
    class_ids = lax.broadcasted_iota(jnp.int32, (tb, k), 1)
    tgt_shifted = jnp.sum(
        jnp.where(class_ids == labels, shifted, 0.0), axis=1, keepdims=True
    )                                                          # (TB, 1)

    # row_loss = -(1-eps)*logp[target] - (eps/K)*sum_k(logp)
    #          = lse - (1-eps)*shifted[target] - (eps/K)*sum_k(shifted)
    row_loss = (
        lse
        - (1.0 - epsilon) * tgt_shifted
        - (epsilon / num_classes) * sum_shifted
    )                                                          # (TB, 1)

    # Mask rows beyond the true batch size (ragged last tile reads padding).
    row_ids = lax.broadcasted_iota(jnp.int32, (tb, 1), 0) + i * tile_rows
    row_loss = jnp.where(row_ids < total_rows, row_loss, 0.0)

    out_ref[0, 0] = out_ref[0, 0] + jnp.sum(row_loss)

    # Fold the /B into a single scalar multiply at the end.
    @pl.when(i == pl.num_programs(0) - 1)
    def _finalize():
        out_ref[0, 0] = out_ref[0, 0] * (1.0 / total_rows)


def _auto_tile_rows(batch, num_classes, itemsize):
    # Keep each pipelined input buffer within ~4 MiB (2x double-buffered =>
    # ~8 MiB of logits buffers): safe on v5e's 16 MiB default scoped VMEM and
    # leaves plenty of headroom on v6e/v7x.
    budget_bytes = 4 * 1024 * 1024
    tb = budget_bytes // max(1, num_classes * itemsize)
    tb = max(8, min(512, (tb // 8) * 8))
    if tb >= batch:
        return batch  # single block equal to the full array dim (always legal)
    return tb


def label_smooth_loss(inputs, targets, *, num_classes, epsilon=0.1, tile_rows=None):
    """inputs: (B, K) float logits (f32 or bf16); targets: (B,) int labels.

    Returns the scalar label-smoothed cross-entropy loss (f32), matching
    LabelSmoothLoss.forward.
    """
    B, K = inputs.shape
    assert K == num_classes, (K, num_classes)
    labels = targets.astype(jnp.int32).reshape(B, 1)

    if tile_rows is None:
        tile_rows = _auto_tile_rows(B, K, jnp.dtype(inputs.dtype).itemsize)
    TB = int(tile_rows)
    if TB < B:
        assert TB % 8 == 0, "tile_rows must be a multiple of 8 when tiling the batch"

    kernel = functools.partial(
        _label_smooth_loss_kernel,
        num_classes=num_classes,
        epsilon=float(epsilon),
        total_rows=B,
        tile_rows=TB,
    )

    out = pl.pallas_call(
        kernel,
        out_shape=jax.ShapeDtypeStruct((1, 1), jnp.float32),
        grid_spec=pl.GridSpec(
            grid=(pl.cdiv(B, TB),),
            in_specs=[
                pl.BlockSpec((TB, 1), lambda i: (i, 0)),  # labels
                pl.BlockSpec((TB, K), lambda i: (i, 0)),  # logits
            ],
            out_specs=pl.BlockSpec(memory_space=pltpu.SMEM),
        ),
        compiler_params=pltpu.CompilerParams(
            dimension_semantics=("arbitrary",)  # resident SMEM accumulator => serial
        ),
    )(labels, inputs)
    return out[0, 0]


def _reference(inputs, targets, *, num_classes, epsilon=0.1):
    x = inputs.astype(jnp.float32)
    logp = jax.nn.log_softmax(x, axis=1)
    one_hot = jax.nn.one_hot(targets, num_classes, dtype=jnp.float32)
    smoothed = (1.0 - epsilon) * one_hot + epsilon / num_classes
    return jnp.sum(jnp.mean(-smoothed * logp, axis=0))


if __name__ == "__main__":
    num_classes = 16
    epsilon = 0.1

    key = jax.random.PRNGKey(0)
    k1, k2, k3, k4 = jax.random.split(key, 4)

    # Case 1: f32 logits, ragged batch (exercises multi-tile grid + row masking).
    B1 = 20
    x1 = jax.random.normal(k1, (B1, num_classes), dtype=jnp.float32)
    t1 = jax.random.randint(k2, (B1,), 0, num_classes, dtype=jnp.int32)
    loss1 = jax.block_until_ready(
        label_smooth_loss(x1, t1, num_classes=num_classes, epsilon=epsilon, tile_rows=8)
    )
    ref1 = _reference(x1, t1, num_classes=num_classes, epsilon=epsilon)
    assert jnp.allclose(loss1, ref1, rtol=1e-5, atol=1e-5), (loss1, ref1)

    # Case 2: bf16 logits (halves HBM traffic; math stays in f32), auto tile.
    B2 = 12
    x2 = jax.random.normal(k3, (B2, num_classes), dtype=jnp.float32).astype(jnp.bfloat16)
    t2 = jax.random.randint(k4, (B2,), 0, num_classes, dtype=jnp.int32)
    loss2 = jax.block_until_ready(
        label_smooth_loss(x2, t2, num_classes=num_classes, epsilon=epsilon)
    )
    ref2 = _reference(x2, t2, num_classes=num_classes, epsilon=epsilon)
    assert jnp.allclose(loss2, ref2, rtol=1e-4, atol=1e-4), (loss2, ref2)

    print("KERNEL_OK")
</pallas_src>

<mosaic_0001>
module attributes {stable_mosaic.version = 11 : i64} {
  func.func @_label_smooth_loss_kernel(%arg0: i32, %arg1: memref<8x1xi32, #tpu.memory_space<vmem>>, %arg2: memref<8x16xf32, #tpu.memory_space<vmem>>, %arg3: memref<1x1xf32, #tpu.memory_space<smem>>) attributes {dimension_semantics = [#tpu.dimension_semantics<arbitrary>], iteration_bounds = array<i64: 3>, scalar_prefetch = 0 : i64, scratch_operands = 0 : i64, tpu.core_type = #tpu.core_type<tc>, window_params = [{transform_indices = @transform_0, window_bounds = array<i64: 8, 1>}, {transform_indices = @transform_1, window_bounds = array<i64: 8, 16>}, {transform_indices = @transform_2, window_bounds = array<i64: 1, 1>}]} {
    %c0_i32 = arith.constant 0 : i32
    %0 = arith.cmpi eq, %arg0, %c0_i32 : i32
    %1 = arith.extui %0 : i1 to i32
    %c0_i32_0 = arith.constant 0 : i32
    %2 = arith.cmpi ne, %1, %c0_i32_0 : i32
    scf.if %2 {
      %cst_17 = arith.constant 0.000000e+00 : f32
      %c0_18 = arith.constant 0 : index
      %c0_19 = arith.constant 0 : index
      %46 = memref.load %arg3[%c0_18, %c0_19] : memref<1x1xf32, #tpu.memory_space<smem>>
      memref.store %cst_17, %arg3[%c0_18, %c0_19] : memref<1x1xf32, #tpu.memory_space<smem>>
    } else {
    }
    %c0 = arith.constant 0 : index
    %c0_1 = arith.constant 0 : index
    %3 = vector.load %arg2[%c0, %c0_1] : memref<8x16xf32, #tpu.memory_space<vmem>>, vector<8x16xf32>
    %cst = arith.constant dense<0xFF800000> : vector<8xf32>
    %4 = vector.multi_reduction <maximumf>, %3, %cst [1] : vector<8x16xf32> to vector<8xf32>
    %5 = vector.shape_cast %4 : vector<8xf32> to vector<8x1xf32>
    %6 = vector.broadcast %5 : vector<8x1xf32> to vector<8x16xf32>
    %7 = arith.subf %3, %6 : vector<8x16xf32>
    %8 = math.exp %7 : vector<8x16xf32>
    %cst_2 = arith.constant dense<0.000000e+00> : vector<8xf32>
    %9 = vector.multi_reduction <add>, %8, %cst_2 [1] : vector<8x16xf32> to vector<8xf32>
    %10 = vector.shape_cast %9 : vector<8xf32> to vector<8x1xf32>
    %11 = math.log %10 : vector<8x1xf32>
    %cst_3 = arith.constant dense<0.000000e+00> : vector<8xf32>
    %12 = vector.multi_reduction <add>, %7, %cst_3 [1] : vector<8x16xf32> to vector<8xf32>
    %13 = vector.shape_cast %12 : vector<8xf32> to vector<8x1xf32>
    %c0_4 = arith.constant 0 : index
    %c0_5 = arith.constant 0 : index
    %14 = vector.load %arg1[%c0_4, %c0_5] : memref<8x1xi32, #tpu.memory_space<vmem>>, vector<8x1xi32>
    %15 = tpu.iota {dimensions = array<i32: 1>} : vector<8x16xi32>
    %16 = vector.broadcast %14 : vector<8x1xi32> to vector<8x16xi32>
    %17 = arith.cmpi eq, %15, %16 : vector<8x16xi32>
    %cst_6 = arith.constant 0.000000e+00 : f32
    %18 = vector.broadcast %cst_6 : f32 to vector<8x16xf32>
    %19 = arith.select %17, %7, %18 : vector<8x16xi1>, vector<8x16xf32>
    %cst_7 = arith.constant dense<0.000000e+00> : vector<8xf32>
    %20 = vector.multi_reduction <add>, %19, %cst_7 [1] : vector<8x16xf32> to vector<8xf32>
    %21 = vector.shape_cast %20 : vector<8xf32> to vector<8x1xf32>
    %cst_8 = arith.constant 0.899999976 : f32
    %22 = vector.broadcast %cst_8 : f32 to vector<8x1xf32>
    %23 = arith.mulf %22, %21 : vector<8x1xf32>
    %24 = arith.subf %11, %23 : vector<8x1xf32>
    %cst_9 = arith.constant 6.250000e-03 : f32
    %25 = vector.broadcast %cst_9 : f32 to vector<8x1xf32>
    %26 = arith.mulf %25, %13 : vector<8x1xf32>
    %27 = arith.subf %24, %26 : vector<8x1xf32>
    %28 = tpu.iota {dimensions = array<i32: 0>} : vector<8x1xi32>
    %c8_i32 = arith.constant 8 : i32
    %29 = arith.muli %arg0, %c8_i32 : i32
    %30 = vector.broadcast %29 : i32 to vector<8x1xi32>
    %31 = arith.addi %28, %30 : vector<8x1xi32>
    %c20_i32 = arith.constant 20 : i32
    %32 = vector.broadcast %c20_i32 : i32 to vector<8x1xi32>
    %33 = arith.cmpi slt, %31, %32 : vector<8x1xi32>
    %cst_10 = arith.constant 0.000000e+00 : f32
    %34 = vector.broadcast %cst_10 : f32 to vector<8x1xf32>
    %35 = arith.select %33, %27, %34 : vector<8x1xi1>, vector<8x1xf32>
    %c0_11 = arith.constant 0 : index
    %c0_12 = arith.constant 0 : index
    %36 = memref.load %arg3[%c0_11, %c0_12] : memref<1x1xf32, #tpu.memory_space<smem>>
    %37 = vector.shape_cast %35 : vector<8x1xf32> to vector<1x8x1xf32>
    %cst_13 = arith.constant dense<0.000000e+00> : vector<1xf32>
    %38 = vector.multi_reduction <add>, %37, %cst_13 [1, 2] : vector<1x8x1xf32> to vector<1xf32>
    %39 = vector.shape_cast %38 : vector<1xf32> to vector<1x1x1xf32>
    %40 = vector.extract %39[0, 0, 0] : f32 from vector<1x1x1xf32>
    %41 = arith.addf %36, %40 : f32
    %c0_14 = arith.constant 0 : index
    %c0_15 = arith.constant 0 : index
    %42 = memref.load %arg3[%c0_14, %c0_15] : memref<1x1xf32, #tpu.memory_space<smem>>
    memref.store %41, %arg3[%c0_14, %c0_15] : memref<1x1xf32, #tpu.memory_space<smem>>
    %c2_i32 = arith.constant 2 : i32
    %43 = arith.cmpi eq, %arg0, %c2_i32 : i32
    %44 = arith.extui %43 : i1 to i32
    %c0_i32_16 = arith.constant 0 : i32
    %45 = arith.cmpi ne, %44, %c0_i32_16 : i32
    scf.if %45 {
      %c0_17 = arith.constant 0 : index
      %c0_18 = arith.constant 0 : index
      %46 = memref.load %arg3[%c0_17, %c0_18] : memref<1x1xf32, #tpu.memory_space<smem>>
      %cst_19 = arith.constant 5.000000e-02 : f32
      %47 = arith.mulf %46, %cst_19 : f32
      %c0_20 = arith.constant 0 : index
      %c0_21 = arith.constant 0 : index
      %48 = memref.load %arg3[%c0_20, %c0_21] : memref<1x1xf32, #tpu.memory_space<smem>>
      memref.store %47, %arg3[%c0_20, %c0_21] : memref<1x1xf32, #tpu.memory_space<smem>>
    } else {
    }
    return
  }
  func.func @transform_0(%arg0: i32) -> (i32, i32) {
    %c0_i32 = arith.constant 0 : i32
    %c0_i32_0 = arith.constant 0 : i32
    return %arg0, %c0_i32 : i32, i32
  }
  func.func @transform_1(%arg0: i32) -> (i32, i32) {
    %c0_i32 = arith.constant 0 : i32
    %c0_i32_0 = arith.constant 0 : i32
    return %arg0, %c0_i32 : i32, i32
  }
  func.func @transform_2(%arg0: i32) -> (i32, i32) {
    %c0_i32 = arith.constant 0 : i32
    %c0_i32_0 = arith.constant 0 : i32
    %c0_i32_1 = arith.constant 0 : i32
    return %c0_i32, %c0_i32_0 : i32, i32
  }
}

</mosaic_0001>

<llo_original>
// kernel: tpu_custom_call.1
$region0: #{tpu_custom_call.1}
  #allocation0 [shape = 'u32[]', space=smem, size = 0x4, offset = 0x4, fixed_abs, tag = 'smem constant byte address 0x4 - core index']
  #allocation1 [shape = 'u32[144,128]{1,0:T(1,128)}', space=vmem, size = 0x12000, scoped, tag = 'internal scratch']
  %s0 = inlined_call_operand.vmem [shape: s32[20,1], index: 0, kind: input, shape index: {}]
  %s1 = inlined_call_operand.vmem [shape: f32[20,16], index: 1, kind: input, shape index: {}]
  %s2 = inlined_call_operand.hbm [shape: f32[1,1], index: 2, kind: output, shape index: {}]
  %s3 = sld [smem:[#allocation0]]
  $region49: #{tpu_custom_call.1} parent=0
    _
  %s5 = ssub.s32 1, %s3
  %s6 = scalar_select 0, %s5, %s3
  $region1: #{tpu_custom_call.1} parent=0
    #allocation2 [shape = 'u8[512]{0}', space=smem, size = 0x200, scoped, tag = 'output window, operand 0, single buffered']
    #allocation3 [shape = 's32[2]{0}', space=sflag, size = 0x8, scoped, tag = 'scoped memory for tpu_custom_call.1']
    %7 = vsyncpa [#allocation3], 0
    loop: start=0, step=1, limit=5
    $region2: #{tpu_custom_call.1} parent=1 // loop_pre_header
      _
    $region3: #{tpu_custom_call.1} parent=1 // loop_header
      %s9 = sphi 0, %s13
      %p10 = scmp.ge.s32.totalorder %s9, 5
      %s19 = sphi 0, %s21
      %s22 = sphi 0, %s19
      %s23 = sphi 0, %s22
      %s39 = sphi 0, %s23
      %s45 = sphi 0, %s47
      %s48 = sphi 0, %s45
      %s49 = sphi 0, %s48
      %s65 = sphi 0, %s49
      %s69 = sphi 0, %s69
      %s71 = sphi 0, %s69
      %s72 = sphi 0, %s71
      %s86 = sphi 0, %s72
    $region4: #{tpu_custom_call.1} parent=1 // loop_header_branch
      %12 = sbr.rel (%p10) target = $region8
    $region5: #{tpu_custom_call.1} parent=1 // loop_body
      %s14 = ssub.s32 %s9, 1
      %s15 = ssub.s32 %s9, 2
      %s16 = sadd.s32 %s9, 1
      %s17 = ssub.s32 %s9, %s16
      %p18 = scmp.eq.s32.totalorder %s17, 0
      %s20 = sadd.s32 %s19, 1
      %s21 = scalar_select %p18, %s19, %s20
      %p24 = pneg %p18
      %p25 = scmp.eq.s32.totalorder %s9, 2
      %p26 = por %p24, %p25
      %p27 = scmp.ne.s32.totalorder %s19, %s22
      %p28 = scmp.eq.s32.totalorder %s9, 0
      %p29 = por %p27, %p28
      %p30 = scmp.ne.s32.totalorder %s19, %s22
      %p31 = scmp.eq.s32.totalorder %s14, 2
      %p32 = por %p30, %p31
      %p33 = scmp.ne.s32.totalorder %s22, %s23
      %p34 = scmp.eq.s32.totalorder %s14, 0
      %p35 = por %p33, %p34
      %p36 = scmp.ne.s32.totalorder %s22, %s23
      %p37 = scmp.eq.s32.totalorder %s15, 2
      %p38 = por %p36, %p37
      %p40 = scmp.ne.s32.totalorder %s23, %s39
      %p41 = scmp.eq.s32.totalorder %s15, 0
      %p42 = por %p40, %p41
      %s43 = ssub.s32 %s9, %s16
      %p44 = scmp.eq.s32.totalorder %s43, 0
      %s46 = sadd.s32 %s45, 1
      %s47 = scalar_select %p44, %s45, %s46
      %p50 = pneg %p44
      %p51 = scmp.eq.s32.totalorder %s9, 2
      %p52 = por %p50, %p51
      %p53 = scmp.ne.s32.totalorder %s45, %s48
      %p54 = scmp.eq.s32.totalorder %s9, 0
      %p55 = por %p53, %p54
      %p56 = scmp.ne.s32.totalorder %s45, %s48
      %p57 = scmp.eq.s32.totalorder %s14, 2
      %p58 = por %p56, %p57
      %p59 = scmp.ne.s32.totalorder %s48, %s49
      %p60 = scmp.eq.s32.totalorder %s14, 0
      %p61 = por %p59, %p60
      %p62 = scmp.ne.s32.totalorder %s48, %s49
      %p63 = scmp.eq.s32.totalorder %s15, 2
      %p64 = por %p62, %p63
      %p66 = scmp.ne.s32.totalorder %s49, %s65
      %p67 = scmp.eq.s32.totalorder %s15, 0
      %p68 = por %p66, %p67
      %s70 = sadd.s32 %s69, 1
      %p73 = scmp.eq.s32.totalorder %s9, 2
      %p74 = scmp.ne.s32.totalorder %s69, %s71
      %p75 = scmp.eq.s32.totalorder %s9, 0
      %p76 = por %p74, %p75
      %p77 = scmp.ne.s32.totalorder %s69, %s71
      %p78 = scmp.eq.s32.totalorder %s14, 2
      %p79 = por %p77, %p78
      %p80 = scmp.ne.s32.totalorder %s71, %s72
      %p81 = scmp.eq.s32.totalorder %s14, 0
      %p82 = por %p80, %p81
      %p83 = scmp.ne.s32.totalorder %s71, %s72
      %p84 = scmp.eq.s32.totalorder %s15, 2
      %p85 = por %p83, %p84
      %p87 = scmp.ne.s32.totalorder %s72, %s86
      %p88 = scmp.eq.s32.totalorder %s15, 0
      %p89 = por %p87, %p88
      %p90 = scmp.le.s32.totalorder 1, %s9
      %p91 = scmp.lt.s32.totalorder %s9, 4
      %p92 = pnand %p90, %p91
      %p93 = pneg %p92
      // Predicated region
      $region9: #{tpu_custom_call.1} parent=5 // pred_check
        _
      $region10: #{tpu_custom_call.1} parent=5 // pred_check_branch
        %95 = sbr.rel (%p92) target = $region12
      $region11: #{tpu_custom_call.1} parent=5 // pred_region
        %s96 = ssub.s32 %s9, 1
      $region12: #{tpu_custom_call.1} parent=5 // pred_fallthru
        _
      %p97 = scmp.lt.s32.totalorder %s9, 3
      // Predicated region
      $region13: #{tpu_custom_call.1} parent=5 // pred_check
        %p98 = pneg %p97
      $region14: #{tpu_custom_call.1} parent=5 // pred_check_branch
        %100 = sbr.rel (%p98) target = $region16
      $region15: #{tpu_custom_call.1} parent=5 // pred_region
        // Predicated region
        $region17: #{tpu_custom_call.1} parent=15 // pred_check
          %p101 = pneg %p29
        $region18: #{tpu_custom_call.1} parent=15 // pred_check_branch
          %103 = sbr.rel (%p101) target = $region20
        $region19: #{tpu_custom_call.1} parent=15 // pred_region
          %p104 = scmp.lt.s32.totalorder %s9, 2
          %s105 = scalar_select %p104, %s9, 2
          %s106 = smul.addr %s105, 8
          %s107 = scalar_lea.vmem %s0, %s106
        $region20: #{tpu_custom_call.1} parent=15 // pred_fallthru
          _
        // Predicated region
        $region21: #{tpu_custom_call.1} parent=15 // pred_check
          %p108 = pneg %p55
        $region22: #{tpu_custom_call.1} parent=15 // pred_check_branch
          %110 = sbr.rel (%p108) target = $region24
        $region23: #{tpu_custom_call.1} parent=15 // pred_region
          %p111 = scmp.lt.s32.totalorder %s9, 2
          %s112 = scalar_select %p111, %s9, 2
          %s113 = smul.addr %s112, 8
          %s114 = scalar_lea.vmem %s1, %s113
        $region24: #{tpu_custom_call.1} parent=15 // pred_fallthru
          _
      $region16: #{tpu_custom_call.1} parent=5 // pred_fallthru
        _
      %p115 = scmp.le.s32.totalorder 1, %s9
      %p116 = scmp.lt.s32.totalorder %s9, 4
      %p117 = pnand %p115, %p116
      %p118 = pneg %p117
      // Predicated region
      $region25: #{tpu_custom_call.1} parent=5 // pred_check
        _
      $region26: #{tpu_custom_call.1} parent=5 // pred_check_branch
        %120 = sbr.rel (%p117) target = $region28
      $region27: #{tpu_custom_call.1} parent=5 // pred_region
        %s121 = ssub.s32 %s9, 1
        %p122 = scmp.lt.s32.totalorder %s14, 2
        %s123 = scalar_select %p122, %s14, 2
        %s124 = smul.addr %s123, 8
        %s125 = scalar_lea.vmem %s0, %s124
        %p126 = pneg %p35
        %p127 = pneg %p32
        %p128 = scmp.lt.s32.totalorder %s14, 2
        %s129 = scalar_select %p128, %s14, 2
        %s130 = smul.addr %s129, 8
        %s131 = scalar_lea.vmem %s1, %s130
        %p132 = pneg %p61
        %p133 = pneg %p58
        %p134 = pneg %p82
        %p135 = pneg %p79
        %p136 = scmp.lt.s32.totalorder %s14, 2
        %s137 = scalar_select %p136, %s14, 2
        %s138 = smul.addr %s137, 8
        %s139 = scalar_lea.vmem %s0, %s138
        %p140 = scmp.lt.s32.totalorder %s14, 2
        %s141 = scalar_select %p140, %s14, 2
        %s142 = smul.addr %s141, 8
        %s143 = scalar_lea.vmem %s1, %s142
        %p144 = scmp.eq.s32.totalorder %s14, 0
        // Predicated region
        $region29: #{tpu_custom_call.1} parent=27 // pred_check
          %p145 = pneg %p144
        $region30: #{tpu_custom_call.1} parent=27 // pred_check_branch
          %147 = sbr.rel (%p145) target = $region32
        $region31: #{tpu_custom_call.1} parent=27 // pred_region
          %s148 = scalar_lea.smem [#allocation2], 0
          %149 = sst [smem:[%s148]] 0.0
        $region32: #{tpu_custom_call.1} parent=27 // pred_fallthru
          _
        %v150 = vld [vmem:[%s143] sm:$0xff]
        %vm151 = vcmask 130048
        %v152 = vsel %vm151, %v150, -inf
        %153 = vmax.xlane.f32.xlu0 %v152
        %v154 = vpop.xlane.xlu0 %153
        %v155 = vsub.f32 %v150, %v154
        %v156 = vmul.f32 %v155, 1.442695
        %v157 = vpow.pop %v156
        %v158 = vsel %vm151, %v157, 0.0
        %159 = vadd.xlane.f32.xlu0 %v158
        %v160 = vpop.xlane.xlu0 %159
        %v161 = vlog2.pop %v160
        %v162 = vmul.f32 %v161, 0.6931472
        %v163 = vsel %vm151, %v155, 0.0
        %164 = vadd.xlane.f32.xlu0 %v163
        %v165 = vpop.xlane.xlu0 %164
        %v166 = vld [vmem:[%s139] sm:$0xff]
        %v167 = vlaneseq
        %v168 = vand.u32 %v167, 127
        %169 = vset.pattern.permute.xlu0 0
        %170 = vperm.xlu0 %169, %v166
        %v171 = vpop.permute.xlu0 %170
        %vm172 = vcmp.eq.s32.totalorder %v168, %v171
        %v173 = vsel %vm172, %v155, 0.0
        %v174 = vsel %vm151, %v173, 0.0
        %175 = vadd.xlane.f32.xlu0 %v174
        %v176 = vpop.xlane.xlu0 %175
        %v177 = vmul.f32 %v176, 0.9
        %v178 = vsub.f32 %v162, %v177
        %v179 = vmul.f32 %v165, 0.00625
        %v180 = vsub.f32 %v178, %v179
        %v181 = vlaneseq
        %v182 = vshrl.u32 %v181, 7
        %s183 = smul.u32 %s14, 8
        %v184 = vstv %s183
        %v185 = vadd.s32 %v182, %v184
        %vm186 = vcmp.lt.s32.totalorder %v185, 20
        %v187 = vsel %vm186, %v180, 0.0
        %s188 = sld [smem:[#allocation2]]
        %vm189 = vcmask 7168
        %v190 = vsel %vm189, %v187, 0.0
        %191 = vadd.xlane.f32.xlu0 %v190
        %v192 = vpop.xlane.xlu0 %191
        %v193 = vrot.slane %v192, 4
        %v194 = vadd.f32 %v192, %v193
        %v195 = vrot.slane %v194, 2
        %v196 = vadd.f32 %v194, %v195
        %v197 = vrot.slane %v196, 1
        %v198 = vadd.f32 %v196, %v197
        %s199 = vtos %v198
        %s200 = sadd.f32 %s188, %s199
        %s201 = scalar_lea.smem [#allocation2], 0
        %202 = sst [smem:[%s201]] %s200
        %p203 = scmp.eq.s32.totalorder %s14, 2
        // Predicated region
        $region33: #{tpu_custom_call.1} parent=27 // pred_check
          %p204 = pneg %p203
        $region34: #{tpu_custom_call.1} parent=27 // pred_check_branch
          %206 = sbr.rel (%p204) target = $region36
        $region35: #{tpu_custom_call.1} parent=27 // pred_region
          %s207 = sld [smem:[#allocation2]]
          %s208 = smul.f32 %s207, 0.05
          %209 = sst [smem:[%s201]] %s208
        $region36: #{tpu_custom_call.1} parent=27 // pred_fallthru
          _
        // Predicated region
        $region37: #{tpu_custom_call.1} parent=27 // pred_check
          %p210 = pneg %p79
        $region38: #{tpu_custom_call.1} parent=27 // pred_check_branch
          %212 = sbr.rel (%p210) target = $region40
        $region39: #{tpu_custom_call.1} parent=27 // pred_region
          %s214 = ssub.s32 16, 16
          %215 = vsyncadd [#allocation3], %s214
          %218 = dma.smem_to_hbm [#allocation2], 16, %s2, [#allocation3]
        $region40: #{tpu_custom_call.1} parent=27 // pred_fallthru
          _
        // Predicated region
        $region41: #{tpu_custom_call.1} parent=27 // pred_check
          %p219 = pneg %p79
        $region42: #{tpu_custom_call.1} parent=27 // pred_check_branch
          %221 = sbr.rel (%p219) target = $region44
        $region43: #{tpu_custom_call.1} parent=27 // pred_region
          %222 = dma.done [#allocation3], 16
        $region44: #{tpu_custom_call.1} parent=27 // pred_fallthru
          _
        %223 = sfence
      $region28: #{tpu_custom_call.1} parent=5 // pred_fallthru
        _
      %p224 = scmp.le.s32.totalorder 2, %s9
      // Predicated region
      $region45: #{tpu_custom_call.1} parent=5 // pred_check
        %p225 = pneg %p224
      $region46: #{tpu_custom_call.1} parent=5 // pred_check_branch
        %227 = sbr.rel (%p225) target = $region48
      $region47: #{tpu_custom_call.1} parent=5 // pred_region
        %s228 = ssub.s32 %s9, 2
      $region48: #{tpu_custom_call.1} parent=5 // pred_fallthru
        _
    $region6: #{tpu_custom_call.1} parent=1 // loop_footer
      %s13 = sadd.s32 1, %s9
    $region7: #{tpu_custom_call.1} parent=1 // loop_footer_branch
      %8 = sbr.rel target = $region3
    $region8: #{tpu_custom_call.1} parent=1 // loop_exit
      _
    %229 = vsyncpa [#allocation3], 1
    %s230 = scalar_lea.sflag [#allocation3], 1
    %231 = vsyncpa %s230, 1

</llo_original>
